<compile_context>
chip_gen: v5e
topology: v5e:2x2
jax: 0.10.0
libtpu: 0.0.40
codegen_flags: <defaults>
</compile_context>

<pallas_src>
import functools
import math

import jax
import jax.numpy as jnp
from jax import lax
from jax.experimental import pallas as pl
from jax.experimental.pallas import tpu as pltpu


_MASK_VALUE = -0.7 * float(jnp.finfo(jnp.float32).max)
_Q_TILE_CANDIDATES = (512, 256, 128, 64, 32)   # descending; >= 32 keeps int8 mask tiles legal
_K_TILE_CANDIDATES = (1024, 512, 256, 128)     # descending


# --------------------------------------------------------------------------------------
# VMEM capacity / tile-size selection
# --------------------------------------------------------------------------------------

def _vmem_capacity_bytes():
    try:
        cap = int(pltpu.get_tpu_info().vmem_capacity_bytes)
        if cap > 0:
            return cap
    except Exception:
        pass
    return 64 * 1024 * 1024  # conservative fallback (v7x per-TensorCore)


def _choose_block_q_full(B, Lq, Lk, D, Dv, itemsize, attn_itemsize, has_mask, cap):
    """Largest q-tile for the full-row (attn-returning) path that honestly fits VMEM."""
    budget = int(cap * 0.6)            # headroom for compiler scratch / register spills
    lk_pad = max(Lk, 128)
    kv_resident = 2 * Lk * (D + Dv) * itemsize             # K and V, double-buffered

    def bytes_for(tq):
        b = kv_resident
        b += 2 * tq * D * itemsize                         # q tile (double-buffered)
        b += 2 * tq * max(Dv, 128) * itemsize              # out tile (lane-padded)
        b += 2 * tq * lk_pad * attn_itemsize               # attn output tile
        if has_mask:
            b += 2 * tq * lk_pad                           # int8 mask tile
        b += 3 * tq * lk_pad * 4                           # live f32 scores / exp / attn values
        return b

    divisible = [c for c in _Q_TILE_CANDIDATES if c <= Lq and Lq % c == 0]
    tq = None
    for c in divisible:
        if bytes_for(c) <= budget:
            tq = c
            break
    if tq is None:
        tq = divisible[-1] if divisible else Lq            # smallest aligned tile, else full extent

    # v7x megacore: keep at least 2 steps on the parallel grid axes when legal.
    while B * (Lq // tq) < 2 and tq >= 64 and Lq % (tq // 2) == 0:
        tq //= 2
    return tq


def _choose_flash_blocks(B, Lq, Lk, D, Dv, itemsize, has_mask, cap):
    """(tq, tk) for the flash path; biggest tiles that fit the per-generation VMEM budget."""
    budget = int(cap * 0.6)

    def bytes_for(tq, tk):
        tk_pad = max(tk, 128)
        b = 0
        b += 2 * tq * D * itemsize                         # q tile
        b += 2 * tk * (D + Dv) * itemsize                  # K and V tiles
        b += 2 * tq * max(Dv, 128) * itemsize              # out tile
        if has_mask:
            b += 2 * tq * tk_pad                           # int8 mask tile
        b += tq * (2 * 128 + max(Dv, 128)) * 4             # m, l, acc scratch (lane-padded, f32)
        b += 3 * tq * tk_pad * 4                           # live f32 scores / exp values
        return b

    q_cands = [c for c in _Q_TILE_CANDIDATES if c <= Lq and Lq % c == 0] or [Lq]
    k_cands = [c for c in _K_TILE_CANDIDATES if c <= Lk and Lk % c == 0] or [Lk]
    tq, tk = q_cands[-1], k_cands[-1]                      # guaranteed (smallest) fallback
    for cq in q_cands:
        found = False
        for ck in k_cands:
            if bytes_for(cq, ck) <= budget:
                tq, tk = cq, ck
                found = True
                break
        if found:
            break

    while B * (Lq // tq) < 2 and tq >= 64 and Lq % (tq // 2) == 0:
        tq //= 2
    return tq, tk


# --------------------------------------------------------------------------------------
# Kernels
# --------------------------------------------------------------------------------------

def _sdpa_flash_kernel(*refs, inv_temperature, has_mask, causal, block_q, block_k):
    """Online-softmax (flash) kernel: grid (B, Lq/TQ, Lk/TK), Lk axis 'arbitrary'."""
    q_ref, k_ref, v_ref = refs[0], refs[1], refs[2]
    idx = 3
    mask_ref = None
    if has_mask:
        mask_ref = refs[idx]
        idx += 1
    out_ref = refs[idx]
    m_sc, l_sc, acc_sc = refs[idx + 1], refs[idx + 2], refs[idx + 3]

    ki = pl.program_id(2)

    @pl.when(ki == 0)
    def _():
        m_sc[...] = jnp.full_like(m_sc, _MASK_VALUE)
        l_sc[...] = jnp.zeros_like(l_sc)
        acc_sc[...] = jnp.zeros_like(acc_sc)

    q = q_ref[0]                                       # [TQ, D], native dtype -> MXU
    k = k_ref[0]                                       # [TK, D]
    v = v_ref[0]                                       # [TK, Dv]

    # q @ k^T contracting D on both sides (no transpose emitted), f32 accumulation.
    s = lax.dot_general(q, k, (((1,), (1,)), ((), ())),
                        preferred_element_type=jnp.float32)      # [TQ, TK] f32
    s = s * jnp.float32(inv_temperature)                         # scale in f32 (v5e-friendly)

    if causal:
        row = pl.program_id(1) * block_q + lax.broadcasted_iota(jnp.int32, s.shape, 0)
        col = ki * block_k + lax.broadcasted_iota(jnp.int32, s.shape, 1)
        s = jnp.where(col > row, _MASK_VALUE, s)
    if mask_ref is not None:
        s = jnp.where(mask_ref[0] != 0, _MASK_VALUE, s)

    m_prev = m_sc[...]
    m_new = jnp.maximum(m_prev, jnp.max(s, axis=-1, keepdims=True))
    alpha = jnp.exp(m_prev - m_new)
    p = jnp.exp(s - m_new)
    l_sc[...] = alpha * l_sc[...] + jnp.sum(p, axis=-1, keepdims=True)
    acc_sc[...] = alpha * acc_sc[...] + lax.dot_general(
        p.astype(v.dtype), v, (((1,), (0,)), ((), ())),
        preferred_element_type=jnp.float32)
    m_sc[...] = m_new

    @pl.when(ki == pl.num_programs(2) - 1)
    def _():
        # Only the [TQ, Dv] accumulator is normalized (EUP reciprocal + VPU multiply).
        out_ref[0] = (acc_sc[...] * pl.reciprocal(l_sc[...], approx=True)).astype(out_ref.dtype)


def _sdpa_full_kernel(*refs, inv_temperature, has_mask, causal, block_q):
    """Full-row softmax kernel for the attn-returning path: grid (B, Lq/TQ), K/V resident."""
    q_ref, k_ref, v_ref = refs[0], refs[1], refs[2]
    idx = 3
    mask_ref = None
    if has_mask:
        mask_ref = refs[idx]
        idx += 1
    out_ref, attn_ref = refs[idx], refs[idx + 1]

    q = q_ref[0]                                       # [TQ, D]
    k = k_ref[0]                                       # [Lk, D]
    v = v_ref[0]                                       # [Lk, Dv]

    s = lax.dot_general(q, k, (((1,), (1,)), ((), ())),
                        preferred_element_type=jnp.float32)      # [TQ, Lk] f32
    s = s * jnp.float32(inv_temperature)

    if causal:
        row = pl.program_id(1) * block_q + lax.broadcasted_iota(jnp.int32, s.shape, 0)
        col = lax.broadcasted_iota(jnp.int32, s.shape, 1)
        s = jnp.where(col > row, _MASK_VALUE, s)
    if mask_ref is not None:
        s = jnp.where(mask_ref[0] != 0, _MASK_VALUE, s)

    # Numerically-stable softmax; exact divide since these weights are returned to the caller.
    m = jnp.max(s, axis=-1, keepdims=True)
    e = jnp.exp(s - m)
    denom = jnp.sum(e, axis=-1, keepdims=True)
    attn = e / denom
    attn_ref[0] = attn.astype(attn_ref.dtype)

    out = lax.dot_general(attn.astype(v.dtype), v, (((1,), (0,)), ((), ())),
                          preferred_element_type=jnp.float32)    # [TQ, Dv]
    out_ref[0] = out.astype(out_ref.dtype)


# --------------------------------------------------------------------------------------
# Wrapper
# --------------------------------------------------------------------------------------

def scaled_dot_product_attention(q, k, v, mask=None, *, temperature,
                                 return_attn=True, is_causal=False, attn_dtype=None):
    """Pallas implementation of ScaledDotProductAttention.forward (eval-mode dropout).

    mask: optional [B or 1, Lq, Lk] (or [Lq, Lk]) tensor, nonzero/True = masked out.
    is_causal: generate a causal mask in-kernel (no mask DMA); may be combined with `mask`.
    return_attn=False is the fast path (flash online softmax, no B*Lq*Lk writeback).
    attn_dtype: dtype of the returned attention weights (default q.dtype); use bf16 to halve
                the dominant HBM traffic when the weights are needed.
    """
    B, Lq, D = q.shape
    _, Lk, Dv = v.shape
    assert k.shape == (B, Lk, D)

    inv_temperature = 1.0 / float(temperature)
    has_mask = mask is not None
    if has_mask:
        if mask.ndim == 2:
            mask = mask[None]
        mask = mask.astype(jnp.int8)                   # 4x less HBM traffic than int32
        assert mask.shape[0] in (1, B) and mask.shape[1:] == (Lq, Lk)
        mask_broadcast = mask.shape[0] == 1

    itemsize = jnp.dtype(q.dtype).itemsize
    cap = _vmem_capacity_bytes()
    vmem_limit = int(cap * 0.8)

    if not return_attn:
        # ----------------------------- flash path ------------------------------------
        tq, tk = _choose_flash_blocks(B, Lq, Lk, D, Dv, itemsize, has_mask, cap)
        grid = (B, Lq // tq, Lk // tk)

        in_specs = [
            pl.BlockSpec((1, tq, D), lambda b, qi, ki: (b, qi, 0)),
            pl.BlockSpec((1, tk, D), lambda b, qi, ki: (b, ki, 0)),
            pl.BlockSpec((1, tk, Dv), lambda b, qi, ki: (b, ki, 0)),
        ]
        args = [q, k, v]
        if has_mask:
            if mask_broadcast:
                mmap = lambda b, qi, ki: (0, qi, ki)
            else:
                mmap = lambda b, qi, ki: (b, qi, ki)
            in_specs.append(pl.BlockSpec((1, tq, tk), mmap))
            args.append(mask)

        kernel = functools.partial(
            _sdpa_flash_kernel,
            inv_temperature=inv_temperature,
            has_mask=has_mask,
            causal=bool(is_causal),
            block_q=tq,
            block_k=tk,
        )

        out = pl.pallas_call(
            kernel,
            out_shape=jax.ShapeDtypeStruct((B, Lq, Dv), q.dtype),
            grid_spec=pltpu.PrefetchScalarGridSpec(
                num_scalar_prefetch=0,
                grid=grid,
                in_specs=in_specs,
                out_specs=pl.BlockSpec((1, tq, Dv), lambda b, qi, ki: (b, qi, 0)),
                scratch_shapes=[
                    pltpu.VMEM((tq, 1), jnp.float32),   # running max m
                    pltpu.VMEM((tq, 1), jnp.float32),   # running sum l
                    pltpu.VMEM((tq, Dv), jnp.float32),  # f32 output accumulator
                ],
            ),
            compiler_params=pltpu.CompilerParams(
                dimension_semantics=("parallel", "parallel", "arbitrary"),
                vmem_limit_bytes=vmem_limit,
            ),
        )(*args)
        return out, None

    # ------------------------------ attn-returning path ------------------------------
    attn_dt = jnp.dtype(attn_dtype) if attn_dtype is not None else jnp.dtype(q.dtype)
    tq = _choose_block_q_full(B, Lq, Lk, D, Dv, itemsize, attn_dt.itemsize, has_mask, cap)
    grid = (B, Lq // tq) if Lq % tq == 0 else (B, 1)
    if Lq % tq != 0:
        tq = Lq                                        # full-extent fallback

    in_specs = [
        pl.BlockSpec((1, tq, D), lambda b, qi: (b, qi, 0)),
        pl.BlockSpec((1, Lk, D), lambda b, qi: (b, 0, 0)),    # K/V resident across q blocks
        pl.BlockSpec((1, Lk, Dv), lambda b, qi: (b, 0, 0)),
    ]
    args = [q, k, v]
    if has_mask:
        if mask_broadcast:
            mmap = lambda b, qi: (0, qi, 0)
        else:
            mmap = lambda b, qi: (b, qi, 0)
        in_specs.append(pl.BlockSpec((1, tq, Lk), mmap))
        args.append(mask)

    kernel = functools.partial(
        _sdpa_full_kernel,
        inv_temperature=inv_temperature,
        has_mask=has_mask,
        causal=bool(is_causal),
        block_q=tq,
    )

    out, attn = pl.pallas_call(
        kernel,
        out_shape=(
            jax.ShapeDtypeStruct((B, Lq, Dv), q.dtype),
            jax.ShapeDtypeStruct((B, Lq, Lk), attn_dt),
        ),
        grid_spec=pltpu.PrefetchScalarGridSpec(
            num_scalar_prefetch=0,
            grid=grid,
            in_specs=in_specs,
            out_specs=[
                pl.BlockSpec((1, tq, Dv), lambda b, qi: (b, qi, 0)),
                pl.BlockSpec((1, tq, Lk), lambda b, qi: (b, qi, 0)),
            ],
        ),
        compiler_params=pltpu.CompilerParams(
            dimension_semantics=("parallel", "parallel"),
            vmem_limit_bytes=vmem_limit,
        ),
    )(*args)
    return out, attn


# --------------------------------------------------------------------------------------
# Reference + demo
# --------------------------------------------------------------------------------------

def _reference(q, k, v, mask, temperature):
    scores = jnp.einsum("bqd,bkd->bqk", q, k) / temperature
    if mask is not None:
        scores = jnp.where(mask, -jnp.inf, scores)
    attn = jax.nn.softmax(scores, axis=-1)
    out = jnp.einsum("bqk,bkd->bqd", attn, v)
    return out, attn


if __name__ == "__main__":
    B, Lq, Lk, D, Dv = 2, 128, 128, 32, 32
    temperature = math.sqrt(D)

    key = jax.random.PRNGKey(0)
    kq, kk, kv = jax.random.split(key, 3)
    q = jax.random.normal(kq, (B, Lq, D), dtype=jnp.float32)
    k = jax.random.normal(kk, (B, Lk, D), dtype=jnp.float32)
    v = jax.random.normal(kv, (B, Lk, Dv), dtype=jnp.float32)

    # Deterministic causal mask (True = masked out), broadcast over batch (shape [1, Lq, Lk]).
    causal = jnp.triu(jnp.ones((Lq, Lk), dtype=jnp.bool_), k=1)[None]

    ref_out, ref_attn = _reference(q, k, v, jnp.broadcast_to(causal, (B, Lq, Lk)), temperature)
    ref_out_nm, _ = _reference(q, k, v, None, temperature)

    # 1) Module-faithful path: explicit mask, returns (output, attn) like the torch module.
    out, attn = scaled_dot_product_attention(q, k, v, causal, temperature=temperature)
    out, attn = jax.block_until_ready((out, attn))
    assert jnp.allclose(out, ref_out, atol=2e-3, rtol=2e-3)
    assert jnp.allclose(attn, ref_attn, atol=2e-3, rtol=2e-3)

    # 2) Fast path: flash online-softmax, causal mask generated in-kernel (no mask DMA,
    #    no B*Lq*Lk attention writeback).
    out_f, _ = scaled_dot_product_attention(
        q, k, v, None, temperature=temperature, return_attn=False, is_causal=True)
    out_f = jax.block_until_ready(out_f)
    assert jnp.allclose(out_f, ref_out, atol=2e-3, rtol=2e-3)

    # 3) Fast path with an explicit (batch-broadcast) mask.
    out_m, _ = scaled_dot_product_attention(
        q, k, v, causal, temperature=temperature, return_attn=False)
    out_m = jax.block_until_ready(out_m)
    assert jnp.allclose(out_m, ref_out, atol=2e-3, rtol=2e-3)

    # 4) Un-masked fast path.
    out_nm, _ = scaled_dot_product_attention(
        q, k, v, None, temperature=temperature, return_attn=False)
    out_nm = jax.block_until_ready(out_nm)
    assert jnp.allclose(out_nm, ref_out_nm, atol=2e-3, rtol=2e-3)

    print("KERNEL_OK")
</pallas_src>

<mosaic_0001>
module attributes {stable_mosaic.version = 11 : i64} {
  func.func @_sdpa_full_kernel(%arg0: i32, %arg1: i32, %arg2: memref<1x128x32xf32, #tpu.memory_space<vmem>>, %arg3: memref<1x128x32xf32, #tpu.memory_space<vmem>>, %arg4: memref<1x128x32xf32, #tpu.memory_space<vmem>>, %arg5: memref<1x128x128xi8, #tpu.memory_space<vmem>>, %arg6: memref<1x128x32xf32, #tpu.memory_space<vmem>>, %arg7: memref<1x128x128xf32, #tpu.memory_space<vmem>>) attributes {dimension_semantics = [#tpu.dimension_semantics<parallel>, #tpu.dimension_semantics<parallel>], iteration_bounds = array<i64: 2, 1>, scalar_prefetch = 0 : i64, scratch_operands = 0 : i64, tpu.core_type = #tpu.core_type<tc>, window_params = [{transform_indices = @transform_0, window_bounds = array<i64: 1, 128, 32>}, {transform_indices = @transform_1, window_bounds = array<i64: 1, 128, 32>}, {transform_indices = @transform_2, window_bounds = array<i64: 1, 128, 32>}, {transform_indices = @transform_3, window_bounds = array<i64: 1, 128, 128>}, {transform_indices = @transform_4, window_bounds = array<i64: 1, 128, 32>}, {transform_indices = @transform_5, window_bounds = array<i64: 1, 128, 128>}]} {
    %c0 = arith.constant 0 : index
    %c0_0 = arith.constant 0 : index
    %c0_1 = arith.constant 0 : index
    %0 = vector.load %arg2[%c0, %c0_0, %c0_1] : memref<1x128x32xf32, #tpu.memory_space<vmem>>, vector<1x128x32xf32>
    %1 = vector.shape_cast %0 : vector<1x128x32xf32> to vector<128x32xf32>
    %c0_2 = arith.constant 0 : index
    %c0_3 = arith.constant 0 : index
    %c0_4 = arith.constant 0 : index
    %2 = vector.load %arg3[%c0_2, %c0_3, %c0_4] : memref<1x128x32xf32, #tpu.memory_space<vmem>>, vector<1x128x32xf32>
    %3 = vector.shape_cast %2 : vector<1x128x32xf32> to vector<128x32xf32>
    %c0_5 = arith.constant 0 : index
    %c0_6 = arith.constant 0 : index
    %c0_7 = arith.constant 0 : index
    %4 = vector.load %arg4[%c0_5, %c0_6, %c0_7] : memref<1x128x32xf32, #tpu.memory_space<vmem>>, vector<1x128x32xf32>
    %5 = vector.shape_cast %4 : vector<1x128x32xf32> to vector<128x32xf32>
    %cst = arith.constant dense<0.000000e+00> : vector<128x128xf32>
    %6 = tpu.matmul %1, %3, %cst {dimension_numbers = #tpu.dot_dimension_numbers<[1], [1], [0], [0], [0, 0, 1, 0], [], []>} : vector<128x32xf32>, vector<128x32xf32>, vector<128x128xf32> -> vector<128x128xf32>
    %cst_8 = arith.constant 0.176776692 : f32
    %7 = vector.broadcast %cst_8 : f32 to vector<128x128xf32>
    %8 = arith.mulf %6, %7 : vector<128x128xf32>
    %c0_9 = arith.constant 0 : index
    %c0_10 = arith.constant 0 : index
    %c0_11 = arith.constant 0 : index
    %9 = vector.load %arg5[%c0_9, %c0_10, %c0_11] : memref<1x128x128xi8, #tpu.memory_space<vmem>>, vector<1x128x128xi8>
    %10 = vector.shape_cast %9 : vector<1x128x128xi8> to vector<128x128xi8>
    %c0_i8 = arith.constant 0 : i8
    %11 = vector.broadcast %c0_i8 : i8 to vector<128x128xi8>
    %12 = arith.cmpi ne, %10, %11 : vector<128x128xi8>
    %cst_12 = arith.constant -2.38197633E+38 : f32
    %13 = vector.broadcast %cst_12 : f32 to vector<128x128xf32>
    %14 = arith.select %12, %13, %8 : vector<128x128xi1>, vector<128x128xf32>
    %cst_13 = arith.constant dense<0xFF800000> : vector<128xf32>
    %15 = vector.multi_reduction <maximumf>, %14, %cst_13 [1] : vector<128x128xf32> to vector<128xf32>
    %16 = vector.shape_cast %15 : vector<128xf32> to vector<128x1xf32>
    %17 = vector.broadcast %16 : vector<128x1xf32> to vector<128x128xf32>
    %18 = arith.subf %14, %17 : vector<128x128xf32>
    %19 = math.exp %18 : vector<128x128xf32>
    %cst_14 = arith.constant dense<0.000000e+00> : vector<128xf32>
    %20 = vector.multi_reduction <add>, %19, %cst_14 [1] : vector<128x128xf32> to vector<128xf32>
    %21 = vector.shape_cast %20 : vector<128xf32> to vector<128x1xf32>
    %22 = vector.broadcast %21 : vector<128x1xf32> to vector<128x128xf32>
    %23 = arith.divf %19, %22 : vector<128x128xf32>
    %c0_15 = arith.constant 0 : index
    %c0_16 = arith.constant 0 : index
    %c0_17 = arith.constant 0 : index
    %24 = vector.load %arg7[%c0_15, %c0_16, %c0_17] : memref<1x128x128xf32, #tpu.memory_space<vmem>>, vector<1x128x128xf32>
    %25 = vector.shape_cast %24 : vector<1x128x128xf32> to vector<128x128xf32>
    %26 = vector.shape_cast %23 : vector<128x128xf32> to vector<1x128x128xf32>
    tpu.vector_store %arg7[%c0_15, %c0_16, %c0_17], %26 {strides = array<i32>} : memref<1x128x128xf32, #tpu.memory_space<vmem>>, vector<1x128x128xf32>,
    %cst_18 = arith.constant dense<0.000000e+00> : vector<128x32xf32>
    %27 = tpu.matmul %23, %5, %cst_18 {dimension_numbers = #tpu.dot_dimension_numbers<[1], [0], [0], [1], [0, 0, 1, 1], [], []>} : vector<128x128xf32>, vector<128x32xf32>, vector<128x32xf32> -> vector<128x32xf32>
    %c0_19 = arith.constant 0 : index
    %c0_20 = arith.constant 0 : index
    %c0_21 = arith.constant 0 : index
    %28 = vector.load %arg6[%c0_19, %c0_20, %c0_21] : memref<1x128x32xf32, #tpu.memory_space<vmem>>, vector<1x128x32xf32>
    %29 = vector.shape_cast %28 : vector<1x128x32xf32> to vector<128x32xf32>
    %30 = vector.shape_cast %27 : vector<128x32xf32> to vector<1x128x32xf32>
    tpu.vector_store %arg6[%c0_19, %c0_20, %c0_21], %30 {strides = array<i32>} : memref<1x128x32xf32, #tpu.memory_space<vmem>>, vector<1x128x32xf32>,
    return
  }
  func.func @transform_0(%arg0: i32, %arg1: i32) -> (i32, i32, i32) {
    %c0_i32 = arith.constant 0 : i32
    %c0_i32_0 = arith.constant 0 : i32
    return %arg0, %arg1, %c0_i32 : i32, i32, i32
  }
  func.func @transform_1(%arg0: i32, %arg1: i32) -> (i32, i32, i32) {
    %c0_i32 = arith.constant 0 : i32
    %c0_i32_0 = arith.constant 0 : i32
    %c0_i32_1 = arith.constant 0 : i32
    return %arg0, %c0_i32, %c0_i32_0 : i32, i32, i32
  }
  func.func @transform_2(%arg0: i32, %arg1: i32) -> (i32, i32, i32) {
    %c0_i32 = arith.constant 0 : i32
    %c0_i32_0 = arith.constant 0 : i32
    %c0_i32_1 = arith.constant 0 : i32
    return %arg0, %c0_i32, %c0_i32_0 : i32, i32, i32
  }
  func.func @transform_3(%arg0: i32, %arg1: i32) -> (i32, i32, i32) {
    %c0_i32 = arith.constant 0 : i32
    %c0_i32_0 = arith.constant 0 : i32
    %c0_i32_1 = arith.constant 0 : i32
    return %c0_i32, %arg1, %c0_i32_0 : i32, i32, i32
  }
  func.func @transform_4(%arg0: i32, %arg1: i32) -> (i32, i32, i32) {
    %c0_i32 = arith.constant 0 : i32
    %c0_i32_0 = arith.constant 0 : i32
    return %arg0, %arg1, %c0_i32 : i32, i32, i32
  }
  func.func @transform_5(%arg0: i32, %arg1: i32) -> (i32, i32, i32) {
    %c0_i32 = arith.constant 0 : i32
    %c0_i32_0 = arith.constant 0 : i32
    return %arg0, %arg1, %c0_i32 : i32, i32, i32
  }
}

</mosaic_0001>

<llo_original>
// kernel: tpu_custom_call.1
$region0: #{tpu_custom_call.1}
  #allocation0 [shape = 'u32[]', space=smem, size = 0x4, offset = 0x4, fixed_abs, tag = 'smem constant byte address 0x4 - core index']
  #allocation1 [shape = 'u32[72,128]{1,0:T(1,128)}', space=vmem, size = 0x9000, scoped, tag = 'internal scratch']
  %s0 = inlined_call_operand.vmem [shape: f32[2,128,32], index: 0, kind: input, shape index: {}]
  %s1 = inlined_call_operand.vmem [shape: f32[2,128,32], index: 1, kind: input, shape index: {}]
  %s2 = inlined_call_operand.vmem [shape: f32[2,128,32], index: 2, kind: input, shape index: {}]
  %s3 = inlined_call_operand.vmem [shape: s8[1,128,128], index: 3, kind: input, shape index: {}]
  %s4 = inlined_call_operand.vmem [shape: f32[2,128,32], index: 4, kind: output, shape index: {0}]
  %s5 = inlined_call_operand.hbm [shape: f32[2,128,128], index: 5, kind: output, shape index: {1}]
  %6 = xla_tuple %s4, %s5
  %s7 = sld [smem:[#allocation0]]
  $region57: #{tpu_custom_call.1} parent=0
    _
  %s9 = ssub.s32 1, %s7
  %s10 = scalar_select 0, %s9, %s7
  $region1: #{tpu_custom_call.1} parent=0
    #allocation2 [shape = 'u8[131072]{0}', space=vmem, size = 0x20000, scoped, tag = 'output window, operand 1']
    #allocation3 [shape = 's32[2]{0}', space=sflag, size = 0x8, scoped, tag = 'scoped memory for tpu_custom_call.1']
    %11 = vsyncpa [#allocation3], 0
    %s12 = scalar_lea.sflag [#allocation3], 1
    %13 = vsyncpa %s12, 0
    loop: start=0, step=1, limit=4
    $region2: #{tpu_custom_call.1} parent=1 // loop_pre_header
      _
    $region3: #{tpu_custom_call.1} parent=1 // loop_header
      %s15 = sphi 0, %s19
      %p16 = scmp.ge.s32.totalorder %s15, 4
      %s22 = sphi 0, %s34
      %s23 = sphi 0, %s30
      %s24 = sphi 0, %s22
      %s25 = sphi 0, %s23
      %s26 = sphi 0, %s24
      %s27 = sphi 0, %s25
      %s39 = sphi 0, %s41
      %s42 = sphi 0, %s39
      %s43 = sphi 0, %s42
      %s59 = sphi 0, %s43
      %s65 = sphi 0, %s67
      %s68 = sphi 0, %s65
      %s69 = sphi 0, %s68
      %s85 = sphi 0, %s69
      %s91 = sphi 0, %s93
      %s94 = sphi 0, %s91
      %s95 = sphi 0, %s94
      %s111 = sphi 0, %s95
      %s117 = sphi 0, %s119
      %s120 = sphi 0, %s117
      %s121 = sphi 0, %s120
      %s137 = sphi 0, %s121
      %s145 = sphi 0, %s147
      %s148 = sphi 0, %s145
      %s149 = sphi 0, %s148
      %s165 = sphi 0, %s149
      %s173 = sphi 0, %s175
      %s176 = sphi 0, %s173
      %s177 = sphi 0, %s176
      %s193 = sphi 0, %s177
    $region4: #{tpu_custom_call.1} parent=1 // loop_header_branch
      %18 = sbr.rel (%p16) target = $region8
    $region5: #{tpu_custom_call.1} parent=1 // loop_body
      %s20 = ssub.s32 %s15, 1
      %s21 = ssub.s32 %s15, 2
      %s28 = sadd.s32 1, %s23
      %p29 = scmp.ge.s32.totalorder %s28, 1
      %s30 = scalar_select %p29, 0, %s28
      %s31 = sadd.s32 1, %s22
      %s32 = scalar_select %p29, %s31, %s22
      %p33 = scmp.ge.s32.totalorder %s32, 2
      %s34 = scalar_select %p33, 0, %s32
      %s35 = ssub.s32 %s22, %s34
      %s36 = ssub.s32 %s23, %s30
      %s37 = sor.u32 %s35, %s36
      %p38 = scmp.eq.s32.totalorder %s37, 0
      %s40 = sadd.s32 %s39, 1
      %s41 = scalar_select %p38, %s39, %s40
      %p44 = pneg %p38
      %p45 = scmp.eq.s32.totalorder %s15, 1
      %p46 = por %p44, %p45
      %p47 = scmp.ne.s32.totalorder %s39, %s42
      %p48 = scmp.eq.s32.totalorder %s15, 0
      %p49 = por %p47, %p48
      %p50 = scmp.ne.s32.totalorder %s39, %s42
      %p51 = scmp.eq.s32.totalorder %s20, 1
      %p52 = por %p50, %p51
      %p53 = scmp.ne.s32.totalorder %s42, %s43
      %p54 = scmp.eq.s32.totalorder %s20, 0
      %p55 = por %p53, %p54
      %p56 = scmp.ne.s32.totalorder %s42, %s43
      %p57 = scmp.eq.s32.totalorder %s21, 1
      %p58 = por %p56, %p57
      %p60 = scmp.ne.s32.totalorder %s43, %s59
      %p61 = scmp.eq.s32.totalorder %s21, 0
      %p62 = por %p60, %p61
      %s63 = ssub.s32 %s22, %s34
      %p64 = scmp.eq.s32.totalorder %s63, 0
      %s66 = sadd.s32 %s65, 1
      %s67 = scalar_select %p64, %s65, %s66
      %p70 = pneg %p64
      %p71 = scmp.eq.s32.totalorder %s15, 1
      %p72 = por %p70, %p71
      %p73 = scmp.ne.s32.totalorder %s65, %s68
      %p74 = scmp.eq.s32.totalorder %s15, 0
      %p75 = por %p73, %p74
      %p76 = scmp.ne.s32.totalorder %s65, %s68
      %p77 = scmp.eq.s32.totalorder %s20, 1
      %p78 = por %p76, %p77
      %p79 = scmp.ne.s32.totalorder %s68, %s69
      %p80 = scmp.eq.s32.totalorder %s20, 0
      %p81 = por %p79, %p80
      %p82 = scmp.ne.s32.totalorder %s68, %s69
      %p83 = scmp.eq.s32.totalorder %s21, 1
      %p84 = por %p82, %p83
      %p86 = scmp.ne.s32.totalorder %s69, %s85
      %p87 = scmp.eq.s32.totalorder %s21, 0
      %p88 = por %p86, %p87
      %s89 = ssub.s32 %s22, %s34
      %p90 = scmp.eq.s32.totalorder %s89, 0
      %s92 = sadd.s32 %s91, 1
      %s93 = scalar_select %p90, %s91, %s92
      %p96 = pneg %p90
      %p97 = scmp.eq.s32.totalorder %s15, 1
      %p98 = por %p96, %p97
      %p99 = scmp.ne.s32.totalorder %s91, %s94
      %p100 = scmp.eq.s32.totalorder %s15, 0
      %p101 = por %p99, %p100
      %p102 = scmp.ne.s32.totalorder %s91, %s94
      %p103 = scmp.eq.s32.totalorder %s20, 1
      %p104 = por %p102, %p103
      %p105 = scmp.ne.s32.totalorder %s94, %s95
      %p106 = scmp.eq.s32.totalorder %s20, 0
      %p107 = por %p105, %p106
      %p108 = scmp.ne.s32.totalorder %s94, %s95
      %p109 = scmp.eq.s32.totalorder %s21, 1
      %p110 = por %p108, %p109
      %p112 = scmp.ne.s32.totalorder %s95, %s111
      %p113 = scmp.eq.s32.totalorder %s21, 0
      %p114 = por %p112, %p113
      %s115 = ssub.s32 %s23, %s30
      %p116 = scmp.eq.s32.totalorder %s115, 0
      %s118 = sadd.s32 %s117, 1
      %s119 = scalar_select %p116, %s117, %s118
      %p122 = pneg %p116
      %p123 = scmp.eq.s32.totalorder %s15, 1
      %p124 = por %p122, %p123
      %p125 = scmp.ne.s32.totalorder %s117, %s120
      %p126 = scmp.eq.s32.totalorder %s15, 0
      %p127 = por %p125, %p126
      %p128 = scmp.ne.s32.totalorder %s117, %s120
      %p129 = scmp.eq.s32.totalorder %s20, 1
      %p130 = por %p128, %p129
      %p131 = scmp.ne.s32.totalorder %s120, %s121
      %p132 = scmp.eq.s32.totalorder %s20, 0
      %p133 = por %p131, %p132
      %p134 = scmp.ne.s32.totalorder %s120, %s121
      %p135 = scmp.eq.s32.totalorder %s21, 1
      %p136 = por %p134, %p135
      %p138 = scmp.ne.s32.totalorder %s121, %s137
      %p139 = scmp.eq.s32.totalorder %s21, 0
      %p140 = por %p138, %p139
      %s141 = ssub.s32 %s22, %s34
      %s142 = ssub.s32 %s23, %s30
      %s143 = sor.u32 %s141, %s142
      %p144 = scmp.eq.s32.totalorder %s143, 0
      %s146 = sadd.s32 %s145, 1
      %s147 = scalar_select %p144, %s145, %s146
      %p150 = pneg %p144
      %p151 = scmp.eq.s32.totalorder %s15, 1
      %p152 = por %p150, %p151
      %p153 = scmp.ne.s32.totalorder %s145, %s148
      %p154 = scmp.eq.s32.totalorder %s15, 0
      %p155 = por %p153, %p154
      %p156 = scmp.ne.s32.totalorder %s145, %s148
      %p157 = scmp.eq.s32.totalorder %s20, 1
      %p158 = por %p156, %p157
      %p159 = scmp.ne.s32.totalorder %s148, %s149
      %p160 = scmp.eq.s32.totalorder %s20, 0
      %p161 = por %p159, %p160
      %p162 = scmp.ne.s32.totalorder %s148, %s149
      %p163 = scmp.eq.s32.totalorder %s21, 1
      %p164 = por %p162, %p163
      %p166 = scmp.ne.s32.totalorder %s149, %s165
      %p167 = scmp.eq.s32.totalorder %s21, 0
      %p168 = por %p166, %p167
      %s169 = ssub.s32 %s22, %s34
      %s170 = ssub.s32 %s23, %s30
      %s171 = sor.u32 %s169, %s170
      %p172 = scmp.eq.s32.totalorder %s171, 0
      %s174 = sadd.s32 %s173, 1
      %s175 = scalar_select %p172, %s173, %s174
      %p178 = pneg %p172
      %p179 = scmp.eq.s32.totalorder %s15, 1
      %p180 = por %p178, %p179
      %p181 = scmp.ne.s32.totalorder %s173, %s176
      %p182 = scmp.eq.s32.totalorder %s15, 0
      %p183 = por %p181, %p182
      %p184 = scmp.ne.s32.totalorder %s173, %s176
      %p185 = scmp.eq.s32.totalorder %s20, 1
      %p186 = por %p184, %p185
      %p187 = scmp.ne.s32.totalorder %s176, %s177
      %p188 = scmp.eq.s32.totalorder %s20, 0
      %p189 = por %p187, %p188
      %p190 = scmp.ne.s32.totalorder %s176, %s177
      %p191 = scmp.eq.s32.totalorder %s21, 1
      %p192 = por %p190, %p191
      %p194 = scmp.ne.s32.totalorder %s177, %s193
      %p195 = scmp.eq.s32.totalorder %s21, 0
      %p196 = por %p194, %p195
      %p197 = scmp.le.s32.totalorder 1, %s15
      %p198 = scmp.lt.s32.totalorder %s15, 3
      %p199 = pnand %p197, %p198
      %p200 = pneg %p199
      // Predicated region
      $region9: #{tpu_custom_call.1} parent=5 // pred_check
        _
      $region10: #{tpu_custom_call.1} parent=5 // pred_check_branch
        %202 = sbr.rel (%p199) target = $region12
      $region11: #{tpu_custom_call.1} parent=5 // pred_region
        %s203 = ssub.s32 %s15, 1
        // Predicated region
        $region13: #{tpu_custom_call.1} parent=11 // pred_check
          %p204 = pneg %p133
        $region14: #{tpu_custom_call.1} parent=11 // pred_check_branch
          %206 = sbr.rel (%p204) target = $region16
        $region15: #{tpu_custom_call.1} parent=11 // pred_region
          %s207 = smul.u32 4, %s25
          %p208 = scmp.lt.s32.totalorder %s207, 3
          %s209 = scalar_select %p208, %s207, 3
          %s210 = smul.addr %s209, 8
          %s211 = scalar_lea.vmem %s3, %s210
          %s212 = smul.u32 4, %s25
        $region16: #{tpu_custom_call.1} parent=11 // pred_fallthru
          _
      $region12: #{tpu_custom_call.1} parent=5 // pred_fallthru
        _
      %p213 = scmp.lt.s32.totalorder %s15, 2
      // Predicated region
      $region17: #{tpu_custom_call.1} parent=5 // pred_check
        %p214 = pneg %p213
      $region18: #{tpu_custom_call.1} parent=5 // pred_check_branch
        %216 = sbr.rel (%p214) target = $region20
      $region19: #{tpu_custom_call.1} parent=5 // pred_region
        // Predicated region
        $region21: #{tpu_custom_call.1} parent=19 // pred_check
          %p217 = pneg %p49
        $region22: #{tpu_custom_call.1} parent=19 // pred_check_branch
          %219 = sbr.rel (%p217) target = $region24
        $region23: #{tpu_custom_call.1} parent=19 // pred_region
          %s220 = smul.u32 16, %s23
          %p221 = scmp.lt.s32.totalorder %s22, 1
          %s222 = scalar_select %p221, %s22, 1
          %p223 = scmp.lt.s32.totalorder %s220, 15
          %s224 = scalar_select %p223, %s220, 15
          %s225 = smul.addr %s222, 16
          %s226 = sadd.s32 %s224, %s225
          %s227 = smul.addr %s226, 8
          %s228 = scalar_lea.vmem %s0, %s227
          %s229 = smul.u32 16, %s23
        $region24: #{tpu_custom_call.1} parent=19 // pred_fallthru
          _
        // Predicated region
        $region25: #{tpu_custom_call.1} parent=19 // pred_check
          %p230 = pneg %p75
        $region26: #{tpu_custom_call.1} parent=19 // pred_check_branch
          %232 = sbr.rel (%p230) target = $region28
        $region27: #{tpu_custom_call.1} parent=19 // pred_region
          %p233 = scmp.lt.s32.totalorder %s22, 1
          %s234 = scalar_select %p233, %s22, 1
          %s235 = smul.addr %s234, 16
          %s236 = smul.addr %s235, 8
          %s237 = scalar_lea.vmem %s1, %s236
        $region28: #{tpu_custom_call.1} parent=19 // pred_fallthru
          _
        // Predicated region
        $region29: #{tpu_custom_call.1} parent=19 // pred_check
          %p238 = pneg %p101
        $region30: #{tpu_custom_call.1} parent=19 // pred_check_branch
          %240 = sbr.rel (%p238) target = $region32
        $region31: #{tpu_custom_call.1} parent=19 // pred_region
          %p241 = scmp.lt.s32.totalorder %s22, 1
          %s242 = scalar_select %p241, %s22, 1
          %s243 = smul.addr %s242, 16
          %s244 = smul.addr %s243, 8
          %s245 = scalar_lea.vmem %s2, %s244
        $region32: #{tpu_custom_call.1} parent=19 // pred_fallthru
          _
      $region20: #{tpu_custom_call.1} parent=5 // pred_fallthru
        _
      %p246 = scmp.le.s32.totalorder 1, %s15
      %p247 = scmp.lt.s32.totalorder %s15, 3
      %p248 = pnand %p246, %p247
      %p249 = pneg %p248
      // Predicated region
      $region33: #{tpu_custom_call.1} parent=5 // pred_check
        _
      $region34: #{tpu_custom_call.1} parent=5 // pred_check_branch
        %251 = sbr.rel (%p248) target = $region36
      $region35: #{tpu_custom_call.1} parent=5 // pred_region
        %s252 = ssub.s32 %s15, 1
        %s253 = smul.u32 16, %s25
        %p254 = scmp.lt.s32.totalorder %s24, 1
        %s255 = scalar_select %p254, %s24, 1
        %p256 = scmp.lt.s32.totalorder %s253, 15
        %s257 = scalar_select %p256, %s253, 15
        %s258 = smul.addr %s255, 16
        %s259 = sadd.s32 %s257, %s258
        %s260 = smul.addr %s259, 8
        %s261 = scalar_lea.vmem %s0, %s260
        %p262 = pneg %p55
        %p263 = pneg %p52
        %p264 = scmp.lt.s32.totalorder %s24, 1
        %s265 = scalar_select %p264, %s24, 1
        %s266 = smul.addr %s265, 16
        %s267 = smul.addr %s266, 8
        %s268 = scalar_lea.vmem %s1, %s267
        %p269 = pneg %p81
        %p270 = pneg %p78
        %p271 = scmp.lt.s32.totalorder %s24, 1
        %s272 = scalar_select %p271, %s24, 1
        %s273 = smul.addr %s272, 16
        %s274 = smul.addr %s273, 8
        %s275 = scalar_lea.vmem %s2, %s274
        %p276 = pneg %p107
        %p277 = pneg %p104
        %s278 = smul.u32 4, %s25
        %p279 = scmp.lt.s32.totalorder %s278, 3
        %s280 = scalar_select %p279, %s278, 3
        %s281 = smul.addr %s280, 8
        %s282 = scalar_lea.vmem %s3, %s281
        %p283 = pneg %p133
        %p284 = pneg %p130
        %p285 = pneg %p161
        %p286 = pneg %p158
        %s287 = smul.u32 16, %s25
        %p288 = scmp.lt.s32.totalorder %s24, 1
        %s289 = scalar_select %p288, %s24, 1
        %p290 = scmp.lt.s32.totalorder %s287, 15
        %s291 = scalar_select %p290, %s287, 15
        %s292 = smul.addr %s289, 16
        %s293 = sadd.s32 %s291, %s292
        %s294 = smul.addr %s293, 8
        %s295 = scalar_lea.vmem %s4, %s294
        %p296 = pneg %p189
        %p297 = pneg %p186
        %s298 = sand.u32 %s176, 1
        %s299 = scalar_lea.sflag [#allocation3], %s298
        %s300 = sand.u32 %s176, 1
        %s301 = smul.addr %s300, 128
        %s302 = scalar_lea.vmem [#allocation2], %s301
        %s303 = smul.u32 16, %s25
        %p304 = scmp.lt.s32.totalorder %s24, 1
        %s305 = scalar_select %p304, %s24, 1
        %p306 = scmp.lt.s32.totalorder %s303, 15
        %s307 = scalar_select %p306, %s303, 15
        %s308 = smul.addr %s305, 16
        %s309 = sadd.s32 %s307, %s308
        %s310 = smul.addr %s309, 8
        %s311 = scalar_lea.vmem %s0, %s310
        %s312 = smul.u32 16, %s25
        %p313 = scmp.lt.s32.totalorder %s24, 1
        %s314 = scalar_select %p313, %s24, 1
        %s315 = smul.addr %s314, 16
        %s316 = smul.addr %s315, 8
        %s317 = scalar_lea.vmem %s1, %s316
        %p318 = scmp.lt.s32.totalorder %s24, 1
        %s319 = scalar_select %p318, %s24, 1
        %s320 = smul.addr %s319, 16
        %s321 = smul.addr %s320, 8
        %s322 = scalar_lea.vmem %s2, %s321
        %s323 = smul.u32 4, %s25
        %p324 = scmp.lt.s32.totalorder %s323, 3
        %s325 = scalar_select %p324, %s323, 3
        %s326 = smul.addr %s325, 8
        %s327 = scalar_lea.vmem %s3, %s326
        %s328 = smul.u32 4, %s25
        %s329 = smul.u32 16, %s25
        %p330 = scmp.lt.s32.totalorder %s24, 1
        %s331 = scalar_select %p330, %s24, 1
        %p332 = scmp.lt.s32.totalorder %s329, 15
        %s333 = scalar_select %p332, %s329, 15
        %s334 = smul.addr %s331, 16
        %s335 = sadd.s32 %s333, %s334
        %s336 = smul.addr %s335, 8
        %s337 = scalar_lea.vmem %s4, %s336
        %s338 = smul.u32 16, %s25
        %s339 = smul.u32 16, %s25
        %v342 = vld [vmem:[%s311] sm:$0xff]
        %v343 = vld [vmem:[%s311 + $0x8] sm:$0xff]
        %v344 = vld [vmem:[%s311 + $0x10] sm:$0xff]
        %v345 = vld [vmem:[%s311 + $0x18] sm:$0xff]
        %v346 = vld [vmem:[%s311 + $0x20] sm:$0xff]
        %v347 = vld [vmem:[%s311 + $0x28] sm:$0xff]
        %v348 = vld [vmem:[%s311 + $0x30] sm:$0xff]
        %v349 = vld [vmem:[%s311 + $0x38] sm:$0xff]
        %v350 = vld [vmem:[%s311 + $0x40] sm:$0xff]
        %v351 = vld [vmem:[%s311 + $0x48] sm:$0xff]
        %v352 = vld [vmem:[%s311 + $0x50] sm:$0xff]
        %v353 = vld [vmem:[%s311 + $0x58] sm:$0xff]
        %v354 = vld [vmem:[%s311 + $0x60] sm:$0xff]
        %v355 = vld [vmem:[%s311 + $0x68] sm:$0xff]
        %v356 = vld [vmem:[%s311 + $0x70] sm:$0xff]
        %v357 = vld [vmem:[%s311 + $0x78] sm:$0xff]
        %v358 = vld [vmem:[%s317] sm:$0xff]
        %v359 = vld [vmem:[%s317 + $0x8] sm:$0xff]
        %v360 = vld [vmem:[%s317 + $0x10] sm:$0xff]
        %v361 = vld [vmem:[%s317 + $0x18] sm:$0xff]
        %v362 = vld [vmem:[%s317 + $0x20] sm:$0xff]
        %v363 = vld [vmem:[%s317 + $0x28] sm:$0xff]
        %v364 = vld [vmem:[%s317 + $0x30] sm:$0xff]
        %v365 = vld [vmem:[%s317 + $0x38] sm:$0xff]
        %v366 = vld [vmem:[%s317 + $0x40] sm:$0xff]
        %v367 = vld [vmem:[%s317 + $0x48] sm:$0xff]
        %v368 = vld [vmem:[%s317 + $0x50] sm:$0xff]
        %v369 = vld [vmem:[%s317 + $0x58] sm:$0xff]
        %v370 = vld [vmem:[%s317 + $0x60] sm:$0xff]
        %v371 = vld [vmem:[%s317 + $0x68] sm:$0xff]
        %v372 = vld [vmem:[%s317 + $0x70] sm:$0xff]
        %v373 = vld [vmem:[%s317 + $0x78] sm:$0xff]
        %v374 = vld [vmem:[%s322] sm:$0xff]
        %v375 = vld [vmem:[%s322 + $0x8] sm:$0xff]
        %v376 = vld [vmem:[%s322 + $0x10] sm:$0xff]
        %v377 = vld [vmem:[%s322 + $0x18] sm:$0xff]
        %v378 = vld [vmem:[%s322 + $0x20] sm:$0xff]
        %v379 = vld [vmem:[%s322 + $0x28] sm:$0xff]
        %v380 = vld [vmem:[%s322 + $0x30] sm:$0xff]
        %v381 = vld [vmem:[%s322 + $0x38] sm:$0xff]
        %v382 = vld [vmem:[%s322 + $0x40] sm:$0xff]
        %v383 = vld [vmem:[%s322 + $0x48] sm:$0xff]
        %v384 = vld [vmem:[%s322 + $0x50] sm:$0xff]
        %v385 = vld [vmem:[%s322 + $0x58] sm:$0xff]
        %v386 = vld [vmem:[%s322 + $0x60] sm:$0xff]
        %v387 = vld [vmem:[%s322 + $0x68] sm:$0xff]
        %v388 = vld [vmem:[%s322 + $0x70] sm:$0xff]
        %v389 = vld [vmem:[%s322 + $0x78] sm:$0xff]
        %vm390 = vcmask 261120
        %v392 = vsel %vm390, %v342, 0
        %v395 = vsel %vm390, %v343, 0
        %v398 = vsel %vm390, %v344, 0
        %v401 = vsel %vm390, %v345, 0
        %v404 = vsel %vm390, %v346, 0
        %v407 = vsel %vm390, %v347, 0
        %v410 = vsel %vm390, %v348, 0
        %v413 = vsel %vm390, %v349, 0
        %v416 = vsel %vm390, %v350, 0
        %v419 = vsel %vm390, %v351, 0
        %v422 = vsel %vm390, %v352, 0
        %v425 = vsel %vm390, %v353, 0
        %v428 = vsel %vm390, %v354, 0
        %v431 = vsel %vm390, %v355, 0
        %v434 = vsel %vm390, %v356, 0
        %v437 = vsel %vm390, %v357, 0
        %v440 = vsel %vm390, %v358, 0
        %v443 = vsel %vm390, %v359, 0
        %v446 = vsel %vm390, %v360, 0
        %v449 = vsel %vm390, %v361, 0
        %v452 = vsel %vm390, %v362, 0
        %v455 = vsel %vm390, %v363, 0
        %v458 = vsel %vm390, %v364, 0
        %v461 = vsel %vm390, %v365, 0
        %v464 = vsel %vm390, %v366, 0
        %v467 = vsel %vm390, %v367, 0
        %v470 = vsel %vm390, %v368, 0
        %v473 = vsel %vm390, %v369, 0
        %v476 = vsel %vm390, %v370, 0
        %v479 = vsel %vm390, %v371, 0
        %v482 = vsel %vm390, %v372, 0
        %v485 = vsel %vm390, %v373, 0
        %487 = vmatpush.xpose.msra.mxu0 %v485
        %488 = vmatpush.xpose.msra.mxu0 %v482
        %489 = vmatpush.xpose.msra.mxu0 %v479
        %490 = vmatpush.xpose.msra.mxu0 %v476
        %491 = vmatpush.xpose.msra.mxu0 %v473
        %492 = vmatpush.xpose.msra.mxu0 %v470
        %493 = vmatpush.xpose.msra.mxu0 %v467
        %494 = vmatpush.xpose.msra.mxu0 %v464
        %495 = vmatpush.xpose.msra.mxu0 %v461
        %496 = vmatpush.xpose.msra.mxu0 %v458
        %497 = vmatpush.xpose.msra.mxu0 %v455
        %498 = vmatpush.xpose.msra.mxu0 %v452
        %499 = vmatpush.xpose.msra.mxu0 %v449
        %500 = vmatpush.xpose.msra.mxu0 %v446
        %501 = vmatpush.xpose.msra.mxu0 %v443
        %502 = vmatpush.xpose.msra.mxu0 %v440
        %503 = vmatmul.f32.gmra.mxu0 %v392
        %v504 = vpop.f32.mrf.mxu0
        %v505 = vadd.f32 0.0, %v504
        %506 = vmatmul.f32.gmra.mxu0 %v395
        %v507 = vpop.f32.mrf.mxu0
        %v508 = vadd.f32 0.0, %v507
        %509 = vmatmul.f32.gmra.mxu0 %v398
        %v510 = vpop.f32.mrf.mxu0
        %v511 = vadd.f32 0.0, %v510
        %512 = vmatmul.f32.gmra.mxu0 %v401
        %v513 = vpop.f32.mrf.mxu0
        %v514 = vadd.f32 0.0, %v513
        %515 = vmatmul.f32.gmra.mxu0 %v404
        %v516 = vpop.f32.mrf.mxu0
        %v517 = vadd.f32 0.0, %v516
        %518 = vmatmul.f32.gmra.mxu0 %v407
        %v519 = vpop.f32.mrf.mxu0
        %v520 = vadd.f32 0.0, %v519
        %521 = vmatmul.f32.gmra.mxu0 %v410
        %v522 = vpop.f32.mrf.mxu0
        %v523 = vadd.f32 0.0, %v522
        %524 = vmatmul.f32.gmra.mxu0 %v413
        %v525 = vpop.f32.mrf.mxu0
        %v526 = vadd.f32 0.0, %v525
        %527 = vmatmul.f32.gmra.mxu0 %v416
        %v528 = vpop.f32.mrf.mxu0
        %v529 = vadd.f32 0.0, %v528
        %530 = vmatmul.f32.gmra.mxu0 %v419
        %v531 = vpop.f32.mrf.mxu0
        %v532 = vadd.f32 0.0, %v531
        %533 = vmatmul.f32.gmra.mxu0 %v422
        %v534 = vpop.f32.mrf.mxu0
        %v535 = vadd.f32 0.0, %v534
        %536 = vmatmul.f32.gmra.mxu0 %v425
        %v537 = vpop.f32.mrf.mxu0
        %v538 = vadd.f32 0.0, %v537
        %539 = vmatmul.f32.gmra.mxu0 %v428
        %v540 = vpop.f32.mrf.mxu0
        %v541 = vadd.f32 0.0, %v540
        %542 = vmatmul.f32.gmra.mxu0 %v431
        %v543 = vpop.f32.mrf.mxu0
        %v544 = vadd.f32 0.0, %v543
        %545 = vmatmul.f32.gmra.mxu0 %v434
        %v546 = vpop.f32.mrf.mxu0
        %v547 = vadd.f32 0.0, %v546
        %548 = vmatmul.f32.gmra.mxu0 %v437
        %v549 = vpop.f32.mrf.mxu0
        %v550 = vadd.f32 0.0, %v549
        %551 = vdwg.mxu0
        %v552 = vmul.f32 %v505, 0.17677669
        %v553 = vmul.f32 %v508, 0.17677669
        %v554 = vmul.f32 %v511, 0.17677669
        %v555 = vmul.f32 %v514, 0.17677669
        %v556 = vmul.f32 %v517, 0.17677669
        %v557 = vmul.f32 %v520, 0.17677669
        %v558 = vmul.f32 %v523, 0.17677669
        %v559 = vmul.f32 %v526, 0.17677669
        %v560 = vmul.f32 %v529, 0.17677669
        %v561 = vmul.f32 %v532, 0.17677669
        %v562 = vmul.f32 %v535, 0.17677669
        %v563 = vmul.f32 %v538, 0.17677669
        %v564 = vmul.f32 %v541, 0.17677669
        %v565 = vmul.f32 %v544, 0.17677669
        %v566 = vmul.f32 %v547, 0.17677669
        %v567 = vmul.f32 %v550, 0.17677669
        %v568 = vld [vmem:[%s327] sm:$0xff]
        %v569 = vld [vmem:[%s327 + $0x8] sm:$0xff]
        %v570 = vld [vmem:[%s327 + $0x10] sm:$0xff]
        %v571 = vld [vmem:[%s327 + $0x18] sm:$0xff]
        %vm572 = vnez %v568
        %vm573 = vnez %v569
        %vm574 = vnez %v570
        %vm575 = vnez %v571
        %v576 = vsel %vm572, 16843009, 0
        %v577 = vsel %vm573, 16843009, 0
        %v578 = vsel %vm574, 16843009, 0
        %v579 = vsel %vm575, 16843009, 0
        %v580 = vunpack.c.0.s8 %v576
        %v581 = vunpack.c.1.s8 %v576
        %v582 = vunpack.c.2.s8 %v576
        %v583 = vunpack.c.3.s8 %v576
        %v584 = vunpack.c.0.s8 %v577
        %v585 = vunpack.c.1.s8 %v577
        %v586 = vunpack.c.2.s8 %v577
        %v587 = vunpack.c.3.s8 %v577
        %v588 = vunpack.c.0.s8 %v578
        %v589 = vunpack.c.1.s8 %v578
        %v590 = vunpack.c.2.s8 %v578
        %v591 = vunpack.c.3.s8 %v578
        %v592 = vunpack.c.0.s8 %v579
        %v593 = vunpack.c.1.s8 %v579
        %v594 = vunpack.c.2.s8 %v579
        %v595 = vunpack.c.3.s8 %v579
        %v596 = vpack.c.b16 %v580, %v580
        %v597 = vpack.c.b8 %v596, %v596
        %v598 = vpack.c.b16 %v581, %v581
        %v599 = vpack.c.b8 %v598, %v598
        %v600 = vpack.c.b16 %v582, %v582
        %v601 = vpack.c.b8 %v600, %v600
        %v602 = vpack.c.b16 %v583, %v583
        %v603 = vpack.c.b8 %v602, %v602
        %v604 = vpack.c.b16 %v584, %v584
        %v605 = vpack.c.b8 %v604, %v604
        %v606 = vpack.c.b16 %v585, %v585
        %v607 = vpack.c.b8 %v606, %v606
        %v608 = vpack.c.b16 %v586, %v586
        %v609 = vpack.c.b8 %v608, %v608
        %v610 = vpack.c.b16 %v587, %v587
        %v611 = vpack.c.b8 %v610, %v610
        %v612 = vpack.c.b16 %v588, %v588
        %v613 = vpack.c.b8 %v612, %v612
        %v614 = vpack.c.b16 %v589, %v589
        %v615 = vpack.c.b8 %v614, %v614
        %v616 = vpack.c.b16 %v590, %v590
        %v617 = vpack.c.b8 %v616, %v616
        %v618 = vpack.c.b16 %v591, %v591
        %v619 = vpack.c.b8 %v618, %v618
        %v620 = vpack.c.b16 %v592, %v592
        %v621 = vpack.c.b8 %v620, %v620
        %v622 = vpack.c.b16 %v593, %v593
        %v623 = vpack.c.b8 %v622, %v622
        %v624 = vpack.c.b16 %v594, %v594
        %v625 = vpack.c.b8 %v624, %v624
        %v626 = vpack.c.b16 %v595, %v595
        %v627 = vpack.c.b8 %v626, %v626
        %vm628 = vnez %v597
        %vm629 = vnez %v599
        %vm630 = vnez %v601
        %vm631 = vnez %v603
        %vm632 = vnez %v605
        %vm633 = vnez %v607
        %vm634 = vnez %v609
        %vm635 = vnez %v611
        %vm636 = vnez %v613
        %vm637 = vnez %v615
        %vm638 = vnez %v617
        %vm639 = vnez %v619
        %vm640 = vnez %v621
        %vm641 = vnez %v623
        %vm642 = vnez %v625
        %vm643 = vnez %v627
        %v644 = vsel %vm628, 16843009, 0
        %v645 = vsel %vm629, 16843009, 0
        %v646 = vsel %vm630, 16843009, 0
        %v647 = vsel %vm631, 16843009, 0
        %v648 = vsel %vm632, 16843009, 0
        %v649 = vsel %vm633, 16843009, 0
        %v650 = vsel %vm634, 16843009, 0
        %v651 = vsel %vm635, 16843009, 0
        %v652 = vsel %vm636, 16843009, 0
        %v653 = vsel %vm637, 16843009, 0
        %v654 = vsel %vm638, 16843009, 0
        %v655 = vsel %vm639, 16843009, 0
        %v656 = vsel %vm640, 16843009, 0
        %v657 = vsel %vm641, 16843009, 0
        %v658 = vsel %vm642, 16843009, 0
        %v659 = vsel %vm643, 16843009, 0
        %v660 = vunpack.c.0.s8 %v644
        %v661 = vunpack.c.0.s8 %v645
        %v662 = vunpack.c.0.s8 %v646
        %v663 = vunpack.c.0.s8 %v647
        %v664 = vunpack.c.0.s8 %v648
        %v665 = vunpack.c.0.s8 %v649
        %v666 = vunpack.c.0.s8 %v650
        %v667 = vunpack.c.0.s8 %v651
        %v668 = vunpack.c.0.s8 %v652
        %v669 = vunpack.c.0.s8 %v653
        %v670 = vunpack.c.0.s8 %v654
        %v671 = vunpack.c.0.s8 %v655
        %v672 = vunpack.c.0.s8 %v656
        %v673 = vunpack.c.0.s8 %v657
        %v674 = vunpack.c.0.s8 %v658
        %v675 = vunpack.c.0.s8 %v659
        %vm676 = vcmp.ne.s32.totalorder %v660, 0
        %vm677 = vcmp.ne.s32.totalorder %v661, 0
        %vm678 = vcmp.ne.s32.totalorder %v662, 0
        %vm679 = vcmp.ne.s32.totalorder %v663, 0
        %vm680 = vcmp.ne.s32.totalorder %v664, 0
        %vm681 = vcmp.ne.s32.totalorder %v665, 0
        %vm682 = vcmp.ne.s32.totalorder %v666, 0
        %vm683 = vcmp.ne.s32.totalorder %v667, 0
        %vm684 = vcmp.ne.s32.totalorder %v668, 0
        %vm685 = vcmp.ne.s32.totalorder %v669, 0
        %vm686 = vcmp.ne.s32.totalorder %v670, 0
        %vm687 = vcmp.ne.s32.totalorder %v671, 0
        %vm688 = vcmp.ne.s32.totalorder %v672, 0
        %vm689 = vcmp.ne.s32.totalorder %v673, 0
        %vm690 = vcmp.ne.s32.totalorder %v674, 0
        %vm691 = vcmp.ne.s32.totalorder %v675, 0
        %v692 = vsel %vm676, -2.3819763e+38, %v552
        %v693 = vsel %vm677, -2.3819763e+38, %v553
        %v694 = vsel %vm678, -2.3819763e+38, %v554
        %v695 = vsel %vm679, -2.3819763e+38, %v555
        %v696 = vsel %vm680, -2.3819763e+38, %v556
        %v697 = vsel %vm681, -2.3819763e+38, %v557
        %v698 = vsel %vm682, -2.3819763e+38, %v558
        %v699 = vsel %vm683, -2.3819763e+38, %v559
        %v700 = vsel %vm684, -2.3819763e+38, %v560
        %v701 = vsel %vm685, -2.3819763e+38, %v561
        %v702 = vsel %vm686, -2.3819763e+38, %v562
        %v703 = vsel %vm687, -2.3819763e+38, %v563
        %v704 = vsel %vm688, -2.3819763e+38, %v564
        %v705 = vsel %vm689, -2.3819763e+38, %v565
        %v706 = vsel %vm690, -2.3819763e+38, %v566
        %v707 = vsel %vm691, -2.3819763e+38, %v567
        %708 = vmax.xlane.f32.xlu0 %v692
        %v709 = vpop.xlane.xlu0 %708
        %710 = vmax.xlane.f32.xlu0 %v693
        %v711 = vpop.xlane.xlu0 %710
        %712 = vmax.xlane.f32.xlu0 %v694
        %v713 = vpop.xlane.xlu0 %712
        %714 = vmax.xlane.f32.xlu0 %v695
        %v715 = vpop.xlane.xlu0 %714
        %716 = vmax.xlane.f32.xlu0 %v696
        %v717 = vpop.xlane.xlu0 %716
        %718 = vmax.xlane.f32.xlu0 %v697
        %v719 = vpop.xlane.xlu0 %718
        %720 = vmax.xlane.f32.xlu0 %v698
        %v721 = vpop.xlane.xlu0 %720
        %722 = vmax.xlane.f32.xlu0 %v699
        %v723 = vpop.xlane.xlu0 %722
        %724 = vmax.xlane.f32.xlu0 %v700
        %v725 = vpop.xlane.xlu0 %724
        %726 = vmax.xlane.f32.xlu0 %v701
        %v727 = vpop.xlane.xlu0 %726
        %728 = vmax.xlane.f32.xlu0 %v702
        %v729 = vpop.xlane.xlu0 %728
        %730 = vmax.xlane.f32.xlu0 %v703
        %v731 = vpop.xlane.xlu0 %730
        %732 = vmax.xlane.f32.xlu0 %v704
        %v733 = vpop.xlane.xlu0 %732
        %734 = vmax.xlane.f32.xlu0 %v705
        %v735 = vpop.xlane.xlu0 %734
        %736 = vmax.xlane.f32.xlu0 %v706
        %v737 = vpop.xlane.xlu0 %736
        %738 = vmax.xlane.f32.xlu0 %v707
        %v739 = vpop.xlane.xlu0 %738
        %v740 = vsub.f32 %v692, %v709
        %v741 = vsub.f32 %v693, %v711
        %v742 = vsub.f32 %v694, %v713
        %v743 = vsub.f32 %v695, %v715
        %v744 = vsub.f32 %v696, %v717
        %v745 = vsub.f32 %v697, %v719
        %v746 = vsub.f32 %v698, %v721
        %v747 = vsub.f32 %v699, %v723
        %v748 = vsub.f32 %v700, %v725
        %v749 = vsub.f32 %v701, %v727
        %v750 = vsub.f32 %v702, %v729
        %v751 = vsub.f32 %v703, %v731
        %v752 = vsub.f32 %v704, %v733
        %v753 = vsub.f32 %v705, %v735
        %v754 = vsub.f32 %v706, %v737
        %v755 = vsub.f32 %v707, %v739
        %v756 = vmul.f32 %v740, 1.442695
        %v757 = vpow.pop %v756
        %v758 = vmul.f32 %v741, 1.442695
        %v759 = vpow.pop %v758
        %v760 = vmul.f32 %v742, 1.442695
        %v761 = vpow.pop %v760
        %v762 = vmul.f32 %v743, 1.442695
        %v763 = vpow.pop %v762
        %v764 = vmul.f32 %v744, 1.442695
        %v765 = vpow.pop %v764
        %v766 = vmul.f32 %v745, 1.442695
        %v767 = vpow.pop %v766
        %v768 = vmul.f32 %v746, 1.442695
        %v769 = vpow.pop %v768
        %v770 = vmul.f32 %v747, 1.442695
        %v771 = vpow.pop %v770
        %v772 = vmul.f32 %v748, 1.442695
        %v773 = vpow.pop %v772
        %v774 = vmul.f32 %v749, 1.442695
        %v775 = vpow.pop %v774
        %v776 = vmul.f32 %v750, 1.442695
        %v777 = vpow.pop %v776
        %v778 = vmul.f32 %v751, 1.442695
        %v779 = vpow.pop %v778
        %v780 = vmul.f32 %v752, 1.442695
        %v781 = vpow.pop %v780
        %v782 = vmul.f32 %v753, 1.442695
        %v783 = vpow.pop %v782
        %v784 = vmul.f32 %v754, 1.442695
        %v785 = vpow.pop %v784
        %v786 = vmul.f32 %v755, 1.442695
        %v787 = vpow.pop %v786
        %788 = vadd.xlane.f32.xlu0 %v757
        %v789 = vpop.xlane.xlu0 %788
        %790 = vadd.xlane.f32.xlu0 %v759
        %v791 = vpop.xlane.xlu0 %790
        %792 = vadd.xlane.f32.xlu0 %v761
        %v793 = vpop.xlane.xlu0 %792
        %794 = vadd.xlane.f32.xlu0 %v763
        %v795 = vpop.xlane.xlu0 %794
        %796 = vadd.xlane.f32.xlu0 %v765
        %v797 = vpop.xlane.xlu0 %796
        %798 = vadd.xlane.f32.xlu0 %v767
        %v799 = vpop.xlane.xlu0 %798
        %800 = vadd.xlane.f32.xlu0 %v769
        %v801 = vpop.xlane.xlu0 %800
        %802 = vadd.xlane.f32.xlu0 %v771
        %v803 = vpop.xlane.xlu0 %802
        %804 = vadd.xlane.f32.xlu0 %v773
        %v805 = vpop.xlane.xlu0 %804
        %806 = vadd.xlane.f32.xlu0 %v775
        %v807 = vpop.xlane.xlu0 %806
        %808 = vadd.xlane.f32.xlu0 %v777
        %v809 = vpop.xlane.xlu0 %808
        %810 = vadd.xlane.f32.xlu0 %v779
        %v811 = vpop.xlane.xlu0 %810
        %812 = vadd.xlane.f32.xlu0 %v781
        %v813 = vpop.xlane.xlu0 %812
        %814 = vadd.xlane.f32.xlu0 %v783
        %v815 = vpop.xlane.xlu0 %814
        %816 = vadd.xlane.f32.xlu0 %v785
        %v817 = vpop.xlane.xlu0 %816
        %818 = vadd.xlane.f32.xlu0 %v787
        %v819 = vpop.xlane.xlu0 %818
        %v820 = vrcp.pop %v789
        %v821 = vmul.f32 %v789, %v820
        %v822 = vsub.f32 1.0, %v821
        %v823 = vmul.f32 %v820, %v822
        %v824 = vadd.f32 %v820, %v823
        %vm825 = vweird.f32 %v789
        %vm826 = vweird.f32 %v820
        %vm827 = vmor %vm825, %vm826
        %v828 = vsel %vm827, %v820, %v824
        %v829 = vand.u32 2147483647, %v789
        %vm830 = vcmp.eq.f32.partialorder %v829, 8.507059e+37
        %v831 = vand.u32 %v789, 2147483648
        %v832 = vor.u32 1.1754944e-38, %v831
        %v833 = vsel %vm830, %v832, %v828
        %v834 = vmul.f32 %v757, %v833
        %v835 = vrcp.pop %v791
        %v836 = vmul.f32 %v791, %v835
        %v837 = vsub.f32 1.0, %v836
        %v838 = vmul.f32 %v835, %v837
        %v839 = vadd.f32 %v835, %v838
        %vm840 = vweird.f32 %v791
        %vm841 = vweird.f32 %v835
        %vm842 = vmor %vm840, %vm841
        %v843 = vsel %vm842, %v835, %v839
        %v844 = vand.u32 2147483647, %v791
        %vm845 = vcmp.eq.f32.partialorder %v844, 8.507059e+37
        %v846 = vand.u32 %v791, 2147483648
        %v847 = vor.u32 1.1754944e-38, %v846
        %v848 = vsel %vm845, %v847, %v843
        %v849 = vmul.f32 %v759, %v848
        %v850 = vrcp.pop %v793
        %v851 = vmul.f32 %v793, %v850
        %v852 = vsub.f32 1.0, %v851
        %v853 = vmul.f32 %v850, %v852
        %v854 = vadd.f32 %v850, %v853
        %vm855 = vweird.f32 %v793
        %vm856 = vweird.f32 %v850
        %vm857 = vmor %vm855, %vm856
        %v858 = vsel %vm857, %v850, %v854
        %v859 = vand.u32 2147483647, %v793
        %vm860 = vcmp.eq.f32.partialorder %v859, 8.507059e+37
        %v861 = vand.u32 %v793, 2147483648
        %v862 = vor.u32 1.1754944e-38, %v861
        %v863 = vsel %vm860, %v862, %v858
        %v864 = vmul.f32 %v761, %v863
        %v865 = vrcp.pop %v795
        %v866 = vmul.f32 %v795, %v865
        %v867 = vsub.f32 1.0, %v866
        %v868 = vmul.f32 %v865, %v867
        %v869 = vadd.f32 %v865, %v868
        %vm870 = vweird.f32 %v795
        %vm871 = vweird.f32 %v865
        %vm872 = vmor %vm870, %vm871
        %v873 = vsel %vm872, %v865, %v869
        %v874 = vand.u32 2147483647, %v795
        %vm875 = vcmp.eq.f32.partialorder %v874, 8.507059e+37
        %v876 = vand.u32 %v795, 2147483648
        %v877 = vor.u32 1.1754944e-38, %v876
        %v878 = vsel %vm875, %v877, %v873
        %v879 = vmul.f32 %v763, %v878
        %v880 = vrcp.pop %v797
        %v881 = vmul.f32 %v797, %v880
        %v882 = vsub.f32 1.0, %v881
        %v883 = vmul.f32 %v880, %v882
        %v884 = vadd.f32 %v880, %v883
        %vm885 = vweird.f32 %v797
        %vm886 = vweird.f32 %v880
        %vm887 = vmor %vm885, %vm886
        %v888 = vsel %vm887, %v880, %v884
        %v889 = vand.u32 2147483647, %v797
        %vm890 = vcmp.eq.f32.partialorder %v889, 8.507059e+37
        %v891 = vand.u32 %v797, 2147483648
        %v892 = vor.u32 1.1754944e-38, %v891
        %v893 = vsel %vm890, %v892, %v888
        %v894 = vmul.f32 %v765, %v893
        %v895 = vrcp.pop %v799
        %v896 = vmul.f32 %v799, %v895
        %v897 = vsub.f32 1.0, %v896
        %v898 = vmul.f32 %v895, %v897
        %v899 = vadd.f32 %v895, %v898
        %vm900 = vweird.f32 %v799
        %vm901 = vweird.f32 %v895
        %vm902 = vmor %vm900, %vm901
        %v903 = vsel %vm902, %v895, %v899
        %v904 = vand.u32 2147483647, %v799
        %vm905 = vcmp.eq.f32.partialorder %v904, 8.507059e+37
        %v906 = vand.u32 %v799, 2147483648
        %v907 = vor.u32 1.1754944e-38, %v906
        %v908 = vsel %vm905, %v907, %v903
        %v909 = vmul.f32 %v767, %v908
        %v910 = vrcp.pop %v801
        %v911 = vmul.f32 %v801, %v910
        %v912 = vsub.f32 1.0, %v911
        %v913 = vmul.f32 %v910, %v912
        %v914 = vadd.f32 %v910, %v913
        %vm915 = vweird.f32 %v801
        %vm916 = vweird.f32 %v910
        %vm917 = vmor %vm915, %vm916
        %v918 = vsel %vm917, %v910, %v914
        %v919 = vand.u32 2147483647, %v801
        %vm920 = vcmp.eq.f32.partialorder %v919, 8.507059e+37
        %v921 = vand.u32 %v801, 2147483648
        %v922 = vor.u32 1.1754944e-38, %v921
        %v923 = vsel %vm920, %v922, %v918
        %v924 = vmul.f32 %v769, %v923
        %v925 = vrcp.pop %v803
        %v926 = vmul.f32 %v803, %v925
        %v927 = vsub.f32 1.0, %v926
        %v928 = vmul.f32 %v925, %v927
        %v929 = vadd.f32 %v925, %v928
        %vm930 = vweird.f32 %v803
        %vm931 = vweird.f32 %v925
        %vm932 = vmor %vm930, %vm931
        %v933 = vsel %vm932, %v925, %v929
        %v934 = vand.u32 2147483647, %v803
        %vm935 = vcmp.eq.f32.partialorder %v934, 8.507059e+37
        %v936 = vand.u32 %v803, 2147483648
        %v937 = vor.u32 1.1754944e-38, %v936
        %v938 = vsel %vm935, %v937, %v933
        %v939 = vmul.f32 %v771, %v938
        %v940 = vrcp.pop %v805
        %v941 = vmul.f32 %v805, %v940
        %v942 = vsub.f32 1.0, %v941
        %v943 = vmul.f32 %v940, %v942
        %v944 = vadd.f32 %v940, %v943
        %vm945 = vweird.f32 %v805
        %vm946 = vweird.f32 %v940
        %vm947 = vmor %vm945, %vm946
        %v948 = vsel %vm947, %v940, %v944
        %v949 = vand.u32 2147483647, %v805
        %vm950 = vcmp.eq.f32.partialorder %v949, 8.507059e+37
        %v951 = vand.u32 %v805, 2147483648
        %v952 = vor.u32 1.1754944e-38, %v951
        %v953 = vsel %vm950, %v952, %v948
        %v954 = vmul.f32 %v773, %v953
        %v955 = vrcp.pop %v807
        %v956 = vmul.f32 %v807, %v955
        %v957 = vsub.f32 1.0, %v956
        %v958 = vmul.f32 %v955, %v957
        %v959 = vadd.f32 %v955, %v958
        %vm960 = vweird.f32 %v807
        %vm961 = vweird.f32 %v955
        %vm962 = vmor %vm960, %vm961
        %v963 = vsel %vm962, %v955, %v959
        %v964 = vand.u32 2147483647, %v807
        %vm965 = vcmp.eq.f32.partialorder %v964, 8.507059e+37
        %v966 = vand.u32 %v807, 2147483648
        %v967 = vor.u32 1.1754944e-38, %v966
        %v968 = vsel %vm965, %v967, %v963
        %v969 = vmul.f32 %v775, %v968
        %v970 = vrcp.pop %v809
        %v971 = vmul.f32 %v809, %v970
        %v972 = vsub.f32 1.0, %v971
        %v973 = vmul.f32 %v970, %v972
        %v974 = vadd.f32 %v970, %v973
        %vm975 = vweird.f32 %v809
        %vm976 = vweird.f32 %v970
        %vm977 = vmor %vm975, %vm976
        %v978 = vsel %vm977, %v970, %v974
        %v979 = vand.u32 2147483647, %v809
        %vm980 = vcmp.eq.f32.partialorder %v979, 8.507059e+37
        %v981 = vand.u32 %v809, 2147483648
        %v982 = vor.u32 1.1754944e-38, %v981
        %v983 = vsel %vm980, %v982, %v978
        %v984 = vmul.f32 %v777, %v983
        %v985 = vrcp.pop %v811
        %v986 = vmul.f32 %v811, %v985
        %v987 = vsub.f32 1.0, %v986
        %v988 = vmul.f32 %v985, %v987
        %v989 = vadd.f32 %v985, %v988
        %vm990 = vweird.f32 %v811
        %vm991 = vweird.f32 %v985
        %vm992 = vmor %vm990, %vm991
        %v993 = vsel %vm992, %v985, %v989
        %v994 = vand.u32 2147483647, %v811
        %vm995 = vcmp.eq.f32.partialorder %v994, 8.507059e+37
        %v996 = vand.u32 %v811, 2147483648
        %v997 = vor.u32 1.1754944e-38, %v996
        %v998 = vsel %vm995, %v997, %v993
        %v999 = vmul.f32 %v779, %v998
        %v1000 = vrcp.pop %v813
        %v1001 = vmul.f32 %v813, %v1000
        %v1002 = vsub.f32 1.0, %v1001
        %v1003 = vmul.f32 %v1000, %v1002
        %v1004 = vadd.f32 %v1000, %v1003
        %vm1005 = vweird.f32 %v813
        %vm1006 = vweird.f32 %v1000
        %vm1007 = vmor %vm1005, %vm1006
        %v1008 = vsel %vm1007, %v1000, %v1004
        %v1009 = vand.u32 2147483647, %v813
        %vm1010 = vcmp.eq.f32.partialorder %v1009, 8.507059e+37
        %v1011 = vand.u32 %v813, 2147483648
        %v1012 = vor.u32 1.1754944e-38, %v1011
        %v1013 = vsel %vm1010, %v1012, %v1008
        %v1014 = vmul.f32 %v781, %v1013
        %v1015 = vrcp.pop %v815
        %v1016 = vmul.f32 %v815, %v1015
        %v1017 = vsub.f32 1.0, %v1016
        %v1018 = vmul.f32 %v1015, %v1017
        %v1019 = vadd.f32 %v1015, %v1018
        %vm1020 = vweird.f32 %v815
        %vm1021 = vweird.f32 %v1015
        %vm1022 = vmor %vm1020, %vm1021
        %v1023 = vsel %vm1022, %v1015, %v1019
        %v1024 = vand.u32 2147483647, %v815
        %vm1025 = vcmp.eq.f32.partialorder %v1024, 8.507059e+37
        %v1026 = vand.u32 %v815, 2147483648
        %v1027 = vor.u32 1.1754944e-38, %v1026
        %v1028 = vsel %vm1025, %v1027, %v1023
        %v1029 = vmul.f32 %v783, %v1028
        %v1030 = vrcp.pop %v817
        %v1031 = vmul.f32 %v817, %v1030
        %v1032 = vsub.f32 1.0, %v1031
        %v1033 = vmul.f32 %v1030, %v1032
        %v1034 = vadd.f32 %v1030, %v1033
        %vm1035 = vweird.f32 %v817
        %vm1036 = vweird.f32 %v1030
        %vm1037 = vmor %vm1035, %vm1036
        %v1038 = vsel %vm1037, %v1030, %v1034
        %v1039 = vand.u32 2147483647, %v817
        %vm1040 = vcmp.eq.f32.partialorder %v1039, 8.507059e+37
        %v1041 = vand.u32 %v817, 2147483648
        %v1042 = vor.u32 1.1754944e-38, %v1041
        %v1043 = vsel %vm1040, %v1042, %v1038
        %v1044 = vmul.f32 %v785, %v1043
        %v1045 = vrcp.pop %v819
        %v1046 = vmul.f32 %v819, %v1045
        %v1047 = vsub.f32 1.0, %v1046
        %v1048 = vmul.f32 %v1045, %v1047
        %v1049 = vadd.f32 %v1045, %v1048
        %vm1050 = vweird.f32 %v819
        %vm1051 = vweird.f32 %v1045
        %vm1052 = vmor %vm1050, %vm1051
        %v1053 = vsel %vm1052, %v1045, %v1049
        %v1054 = vand.u32 2147483647, %v819
        %vm1055 = vcmp.eq.f32.partialorder %v1054, 8.507059e+37
        %v1056 = vand.u32 %v819, 2147483648
        %v1057 = vor.u32 1.1754944e-38, %v1056
        %v1058 = vsel %vm1055, %v1057, %v1053
        %v1059 = vmul.f32 %v787, %v1058
        %1060 = vst [vmem:[%s302] sm:$0xff] %v834
        %1061 = vst [vmem:[%s302 + $0x8] sm:$0xff] %v849
        %1062 = vst [vmem:[%s302 + $0x10] sm:$0xff] %v864
        %1063 = vst [vmem:[%s302 + $0x18] sm:$0xff] %v879
        %1064 = vst [vmem:[%s302 + $0x20] sm:$0xff] %v894
        %1065 = vst [vmem:[%s302 + $0x28] sm:$0xff] %v909
        %1066 = vst [vmem:[%s302 + $0x30] sm:$0xff] %v924
        %1067 = vst [vmem:[%s302 + $0x38] sm:$0xff] %v939
        %1068 = vst [vmem:[%s302 + $0x40] sm:$0xff] %v954
        %1069 = vst [vmem:[%s302 + $0x48] sm:$0xff] %v969
        %1070 = vst [vmem:[%s302 + $0x50] sm:$0xff] %v984
        %1071 = vst [vmem:[%s302 + $0x58] sm:$0xff] %v999
        %1072 = vst [vmem:[%s302 + $0x60] sm:$0xff] %v1014
        %1073 = vst [vmem:[%s302 + $0x68] sm:$0xff] %v1029
        %1074 = vst [vmem:[%s302 + $0x70] sm:$0xff] %v1044
        %1075 = vst [vmem:[%s302 + $0x78] sm:$0xff] %v1059
        %1076 = vmatpush.msra.mxu0 %v389
        %1077 = vmatpush.msra.mxu0 %v388
        %1078 = vmatpush.msra.mxu0 %v387
        %1079 = vmatpush.msra.mxu0 %v386
        %1080 = vmatpush.msra.mxu0 %v385
        %1081 = vmatpush.msra.mxu0 %v384
        %1082 = vmatpush.msra.mxu0 %v383
        %1083 = vmatpush.msra.mxu0 %v382
        %1084 = vmatpush.msra.mxu0 %v381
        %1085 = vmatpush.msra.mxu0 %v380
        %1086 = vmatpush.msra.mxu0 %v379
        %1087 = vmatpush.msra.mxu0 %v378
        %1088 = vmatpush.msra.mxu0 %v377
        %1089 = vmatpush.msra.mxu0 %v376
        %1090 = vmatpush.msra.mxu0 %v375
        %1091 = vmatpush.msra.mxu0 %v374
        %1092 = vmatmul.f32.gmra.mxu0 %v834
        %v1093 = vpop.f32.mrf.mxu0
        %v1094 = vadd.f32 0.0, %v1093
        %1095 = vmatmul.f32.gmra.mxu0 %v849
        %v1096 = vpop.f32.mrf.mxu0
        %v1097 = vadd.f32 0.0, %v1096
        %1098 = vmatmul.f32.gmra.mxu0 %v864
        %v1099 = vpop.f32.mrf.mxu0
        %v1100 = vadd.f32 0.0, %v1099
        %1101 = vmatmul.f32.gmra.mxu0 %v879
        %v1102 = vpop.f32.mrf.mxu0
        %v1103 = vadd.f32 0.0, %v1102
        %1104 = vmatmul.f32.gmra.mxu0 %v894
        %v1105 = vpop.f32.mrf.mxu0
        %v1106 = vadd.f32 0.0, %v1105
        %1107 = vmatmul.f32.gmra.mxu0 %v909
        %v1108 = vpop.f32.mrf.mxu0
        %v1109 = vadd.f32 0.0, %v1108
        %1110 = vmatmul.f32.gmra.mxu0 %v924
        %v1111 = vpop.f32.mrf.mxu0
        %v1112 = vadd.f32 0.0, %v1111
        %1113 = vmatmul.f32.gmra.mxu0 %v939
        %v1114 = vpop.f32.mrf.mxu0
        %v1115 = vadd.f32 0.0, %v1114
        %1116 = vmatmul.f32.gmra.mxu0 %v954
        %v1117 = vpop.f32.mrf.mxu0
        %v1118 = vadd.f32 0.0, %v1117
        %1119 = vmatmul.f32.gmra.mxu0 %v969
        %v1120 = vpop.f32.mrf.mxu0
        %v1121 = vadd.f32 0.0, %v1120
        %1122 = vmatmul.f32.gmra.mxu0 %v984
        %v1123 = vpop.f32.mrf.mxu0
        %v1124 = vadd.f32 0.0, %v1123
        %1125 = vmatmul.f32.gmra.mxu0 %v999
        %v1126 = vpop.f32.mrf.mxu0
        %v1127 = vadd.f32 0.0, %v1126
        %1128 = vmatmul.f32.gmra.mxu0 %v1014
        %v1129 = vpop.f32.mrf.mxu0
        %v1130 = vadd.f32 0.0, %v1129
        %1131 = vmatmul.f32.gmra.mxu0 %v1029
        %v1132 = vpop.f32.mrf.mxu0
        %v1133 = vadd.f32 0.0, %v1132
        %1134 = vmatmul.f32.gmra.mxu0 %v1044
        %v1135 = vpop.f32.mrf.mxu0
        %v1136 = vadd.f32 0.0, %v1135
        %1137 = vmatmul.f32.gmra.mxu0 %v1059
        %v1138 = vpop.f32.mrf.mxu0
        %v1139 = vadd.f32 0.0, %v1138
        %1140 = vdwg.mxu0
        %1141 = vst.msk [vmem:[%s337] sm:$0xff] %vm390, %v1094
        %1142 = vst.msk [vmem:[%s337 + $0x8] sm:$0xff] %vm390, %v1097
        %1143 = vst.msk [vmem:[%s337 + $0x10] sm:$0xff] %vm390, %v1100
        %1144 = vst.msk [vmem:[%s337 + $0x18] sm:$0xff] %vm390, %v1103
        %1145 = vst.msk [vmem:[%s337 + $0x20] sm:$0xff] %vm390, %v1106
        %1146 = vst.msk [vmem:[%s337 + $0x28] sm:$0xff] %vm390, %v1109
        %1147 = vst.msk [vmem:[%s337 + $0x30] sm:$0xff] %vm390, %v1112
        %1148 = vst.msk [vmem:[%s337 + $0x38] sm:$0xff] %vm390, %v1115
        %1149 = vst.msk [vmem:[%s337 + $0x40] sm:$0xff] %vm390, %v1118
        %1150 = vst.msk [vmem:[%s337 + $0x48] sm:$0xff] %vm390, %v1121
        %1151 = vst.msk [vmem:[%s337 + $0x50] sm:$0xff] %vm390, %v1124
        %1152 = vst.msk [vmem:[%s337 + $0x58] sm:$0xff] %vm390, %v1127
        %1153 = vst.msk [vmem:[%s337 + $0x60] sm:$0xff] %vm390, %v1130
        %1154 = vst.msk [vmem:[%s337 + $0x68] sm:$0xff] %vm390, %v1133
        %1155 = vst.msk [vmem:[%s337 + $0x70] sm:$0xff] %vm390, %v1136
        %1156 = vst.msk [vmem:[%s337 + $0x78] sm:$0xff] %vm390, %v1139
        %s1157 = smul.u32 16, %s25
        %p1158 = scmp.lt.s32.totalorder %s24, 1
        %s1159 = scalar_select %p1158, %s24, 1
        %p1160 = scmp.lt.s32.totalorder %s1157, 15
        %s1161 = scalar_select %p1160, %s1157, 15
        %s1162 = smul.addr %s1159, 16
        %s1163 = sadd.s32 %s1161, %s1162
        %s1164 = smul.addr %s1163, 8
        %s1165 = scalar_lea.vmem %s4, %s1164
        %s1166 = sand.u32 %s176, 1
        %s1167 = scalar_lea.sflag [#allocation3], %s1166
        %s1168 = sand.u32 %s176, 1
        %s1169 = smul.addr %s1168, 128
        %s1170 = scalar_lea.vmem [#allocation2], %s1169
        // Predicated region
        $region37: #{tpu_custom_call.1} parent=35 // pred_check
          %p1171 = pneg %p158
        $region38: #{tpu_custom_call.1} parent=35 // pred_check_branch
          %1173 = sbr.rel (%p1171) target = $region40
        $region39: #{tpu_custom_call.1} parent=35 // pred_region
          %s1174 = smul.u32 16, %s25
        $region40: #{tpu_custom_call.1} parent=35 // pred_fallthru
          _
        // Predicated region
        $region41: #{tpu_custom_call.1} parent=35 // pred_check
          %p1175 = pneg %p186
        $region42: #{tpu_custom_call.1} parent=35 // pred_check_branch
          %1177 = sbr.rel (%p1175) target = $region44
        $region43: #{tpu_custom_call.1} parent=35 // pred_region
          %s1178 = smul.u32 16, %s25
          %1180 = vsyncadd %s1167, 0
          %s1181 = smul.addr %s24, 16
          %s1182 = sadd.s32 %s1178, %s1181
          %s1183 = smul.addr %s1182, 8
          %s1184 = scalar_lea.hbm %s5, %s1183
          %s1185 = sshll.u32 %s1170, 4
          %s1186 = int_to_ptr.vmem [resolvable:$true] %s1185
          %s1187 = sshll.u32 %s1184, 4
          %s1188 = int_to_ptr.hbm [resolvable:$true] %s1187
          %1193 = dma.vmem_to_hbm [thread:$0]  %s1186, 2048, %s1188, %s1167, 128, 128, 8
        $region44: #{tpu_custom_call.1} parent=35 // pred_fallthru
          _
      $region36: #{tpu_custom_call.1} parent=5 // pred_fallthru
        _
      %p1194 = scmp.le.s32.totalorder 2, %s15
      // Predicated region
      $region45: #{tpu_custom_call.1} parent=5 // pred_check
        %p1195 = pneg %p1194
      $region46: #{tpu_custom_call.1} parent=5 // pred_check_branch
        %1197 = sbr.rel (%p1195) target = $region48
      $region47: #{tpu_custom_call.1} parent=5 // pred_region
        %s1198 = ssub.s32 %s15, 2
        // Predicated region
        $region49: #{tpu_custom_call.1} parent=47 // pred_check
          %p1199 = pneg %p164
        $region50: #{tpu_custom_call.1} parent=47 // pred_check_branch
          %1201 = sbr.rel (%p1199) target = $region52
        $region51: #{tpu_custom_call.1} parent=47 // pred_region
          %s1202 = smul.u32 16, %s27
          %p1203 = scmp.lt.s32.totalorder %s26, 1
          %s1204 = scalar_select %p1203, %s26, 1
          %p1205 = scmp.lt.s32.totalorder %s1202, 15
          %s1206 = scalar_select %p1205, %s1202, 15
          %s1207 = smul.addr %s1204, 16
          %s1208 = sadd.s32 %s1206, %s1207
          %s1209 = smul.addr %s1208, 8
          %s1210 = scalar_lea.vmem %s4, %s1209
        $region52: #{tpu_custom_call.1} parent=47 // pred_fallthru
          _
        // Predicated region
        $region53: #{tpu_custom_call.1} parent=47 // pred_check
          %p1211 = pneg %p192
        $region54: #{tpu_custom_call.1} parent=47 // pred_check_branch
          %1213 = sbr.rel (%p1211) target = $region56
        $region55: #{tpu_custom_call.1} parent=47 // pred_region
          %s1214 = sand.u32 %s177, 1
          %s1215 = scalar_lea.sflag [#allocation3], %s1214
          %s1216 = sand.u32 %s177, 1
          %s1217 = smul.addr %s1216, 128
          %s1218 = scalar_lea.vmem [#allocation2], %s1217
          %1220 = dma.done %s1215, 2048
        $region56: #{tpu_custom_call.1} parent=47 // pred_fallthru
          _
      $region48: #{tpu_custom_call.1} parent=5 // pred_fallthru
        _
    $region6: #{tpu_custom_call.1} parent=1 // loop_footer
      %s19 = sadd.s32 1, %s15
    $region7: #{tpu_custom_call.1} parent=1 // loop_footer_branch
      %14 = sbr.rel target = $region3
    $region8: #{tpu_custom_call.1} parent=1 // loop_exit
      _
    %1221 = vsyncpa [#allocation3], 1
    %s1222 = scalar_lea.sflag [#allocation3], 1
    %1223 = vsyncpa %s1222, 1

</llo_original>
